<compile_context>
chip_gen: v7x
topology: tpu7x:2x2x1
jax: 0.10.0
libtpu: 0.0.40
codegen_flags: <defaults>
</compile_context>

<pallas_src>
import functools

import jax
import jax.numpy as jnp
from jax import lax
from jax.experimental import pallas as pl
from jax.experimental.pallas import tpu as pltpu

SCALE = 0.7071067811865476  # sqrt(0.5), matching torch.sqrt(torch.FloatTensor([0.5]))


def attention_kernel(conved_ref, embedded_ref, enc_conved_ref, enc_combined_ref,
                     w1_ref, b1_ref, w2_ref, b2_ref,
                     attn_ref, comb_ref, *, compute_dtype=jnp.float32):
    scale = jnp.float32(SCALE)

    conved = conved_ref[...]              # [Bt, H, T]  (PyTorch conv layout, untouched in HBM)
    embedded = embedded_ref[...]          # [Bt, T, E]
    enc_conved = enc_conved_ref[...]      # [Bt, S, E]
    enc_combined = enc_combined_ref[...]  # [Bt, S, E]
    w1 = w1_ref[...]                      # [H, E]  (hidden2embed, x @ W layout)
    b1 = b1_ref[...]                      # [1, E]
    w2 = w2_ref[...]                      # [E, H]  (embed2hidden, x @ W layout)
    b2 = b2_ref[...]                      # [1, H]

    bt, h_dim, t_len = conved.shape
    e_dim = embedded.shape[-1]

    # Fold the [B,H,T] -> [B,T,H] layout change into the kernel (XLU work hidden under
    # MXU/DMA instead of a separate XLA transpose == an extra HBM pass).
    conved_t = jnp.transpose(conved, (0, 2, 1))                              # [Bt, T, H]

    # Flatten (batch, time) so the shared Linear sees M = Bt*T rows -> better MXU fill.
    x = conved_t.reshape(bt * t_len, h_dim).astype(compute_dtype)
    conved_emb = jnp.dot(x, w1.astype(compute_dtype),
                         preferred_element_type=jnp.float32) + b1            # [Bt*T, E]
    combined = (conved_emb.reshape(bt, t_len, e_dim) + embedded) * scale     # [Bt, T, E]

    # energy = combined @ encoder_conved^T, expressed as dot_general contracting the
    # last dims so no transposed copy of encoder_conved is materialized in VMEM.
    # TODO(synk): for long encoder sequences, tile S with an online softmax instead of
    # materializing the full [T, S] block (required on v7x's 64 MiB VMEM at large S).
    energy = lax.dot_general(
        combined.astype(compute_dtype), enc_conved.astype(compute_dtype),
        dimension_numbers=(((2,), (2,)), ((0,), (0,))),
        preferred_element_type=jnp.float32)                                  # [Bt, T, S]

    # Numerically stable softmax; divide replaced by EUP reciprocal (free slot).
    m = jnp.max(energy, axis=-1, keepdims=True)
    p = jnp.exp(energy - m)
    denom = jnp.sum(p, axis=-1, keepdims=True)
    attn = p * pl.reciprocal(denom, approx=True)                             # [Bt, T, S]

    # attention @ encoder_combined (batched over Bt, contraction over S).
    attn_enc = lax.dot_general(
        attn.astype(compute_dtype), enc_combined.astype(compute_dtype),
        dimension_numbers=(((2,), (1,)), ((0,), (0,))),
        preferred_element_type=jnp.float32)                                  # [Bt, T, E]

    # Shared embed -> hidden Linear, again on flattened (Bt*T, ·) rows.
    attn_enc = jnp.dot(attn_enc.reshape(bt * t_len, e_dim).astype(compute_dtype),
                       w2.astype(compute_dtype),
                       preferred_element_type=jnp.float32) + b2              # [Bt*T, H]
    attn_enc = attn_enc.reshape(bt, t_len, h_dim)                            # [Bt, T, H]

    # Second output written directly in the PyTorch [B, H, T] layout (no wrapper transpose).
    comb = (conved + jnp.transpose(attn_enc, (0, 2, 1))) * scale             # [Bt, H, T]

    attn_ref[...] = attn
    comb_ref[...] = comb.astype(comb_ref.dtype)


def attention_forward(embedded, conved, encoder_conved, encoder_combined,
                      w_h2e, b_h2e, w_e2h, b_e2h,
                      *, block_b=None, use_bf16_matmul=False):
    """
    embedded:         [B, T, E]
    conved:           [B, H, T]
    encoder_conved:   [B, S, E]
    encoder_combined: [B, S, E]
    w_h2e: [E, H] (torch nn.Linear(hidden_dim, emb_dim).weight layout),  b_h2e: [E]
    w_e2h: [H, E] (torch nn.Linear(emb_dim, hidden_dim).weight layout),  b_e2h: [H]
    returns: attention [B, T, S], attention_combined [B, H, T]
    """
    B, T, E = embedded.shape
    H = conved.shape[1]
    S = encoder_conved.shape[1]

    if block_b is None:
        block_b = min(B, 8)
    assert B % block_b == 0, "batch size must be divisible by block_b"
    num_blocks = B // block_b

    # Torch nn.Linear computes x @ W^T; pre-transpose weights once on the host side.
    w1 = w_h2e.T                 # [H, E]
    b1 = b_h2e.reshape(1, E)
    w2 = w_e2h.T                 # [E, H]
    b2 = b_e2h.reshape(1, H)

    compute_dtype = jnp.bfloat16 if use_bf16_matmul else jnp.float32
    kernel = functools.partial(attention_kernel, compute_dtype=compute_dtype)

    attn, comb = pl.pallas_call(
        kernel,
        out_shape=(
            jax.ShapeDtypeStruct((B, T, S), jnp.float32),
            jax.ShapeDtypeStruct((B, H, T), jnp.float32),
        ),
        grid_spec=pltpu.PrefetchScalarGridSpec(
            num_scalar_prefetch=0,
            grid=(num_blocks,),
            in_specs=[
                pl.BlockSpec((block_b, H, T), lambda b: (b, 0, 0)),   # conved [B,H,T]
                pl.BlockSpec((block_b, T, E), lambda b: (b, 0, 0)),   # embedded
                pl.BlockSpec((block_b, S, E), lambda b: (b, 0, 0)),   # encoder_conved
                pl.BlockSpec((block_b, S, E), lambda b: (b, 0, 0)),   # encoder_combined
                pl.BlockSpec((H, E), lambda b: (0, 0)),               # w1 (resident across grid)
                pl.BlockSpec((1, E), lambda b: (0, 0)),               # b1
                pl.BlockSpec((E, H), lambda b: (0, 0)),               # w2
                pl.BlockSpec((1, H), lambda b: (0, 0)),               # b2
            ],
            out_specs=[
                pl.BlockSpec((block_b, T, S), lambda b: (b, 0, 0)),   # attention [B,T,S]
                pl.BlockSpec((block_b, H, T), lambda b: (b, 0, 0)),   # attention_combined [B,H,T]
            ],
        ),
        compiler_params=pltpu.CompilerParams(
            dimension_semantics=("parallel",),          # megacore sharding over batch blocks
            vmem_limit_bytes=32 * 1024 * 1024,          # explicit scoped-VMEM budget
        ),
    )(conved, embedded, encoder_conved, encoder_combined, w1, b1, w2, b2)

    return attn, comb


def attention_reference(embedded, conved, encoder_conved, encoder_combined,
                        w_h2e, b_h2e, w_e2h, b_e2h):
    """Pure-JAX reference mirroring the PyTorch forward exactly."""
    conved_t = jnp.transpose(conved, (0, 2, 1))                               # [B, T, H]
    conved_emb = jnp.einsum('bth,eh->bte', conved_t, w_h2e) + b_h2e
    combined = (conved_emb + embedded) * SCALE
    energy = jnp.einsum('bte,bse->bts', combined, encoder_conved)
    attention = jax.nn.softmax(energy, axis=-1)
    attention_encoding = jnp.einsum('bts,bse->bte', attention, encoder_combined)
    attention_encoding = jnp.einsum('bte,he->bth', attention_encoding, w_e2h) + b_e2h
    attention_combined = (conved + jnp.transpose(attention_encoding, (0, 2, 1))) * SCALE
    return attention, attention_combined


if __name__ == "__main__":
    B, T, S, E, H = 2, 8, 16, 32, 64

    key = jax.random.PRNGKey(0)
    k_emb, k_conv, k_enc_c, k_enc_b, k_w1, k_b1, k_w2, k_b2 = jax.random.split(key, 8)

    embedded = jax.random.normal(k_emb, (B, T, E), dtype=jnp.float32)
    conved = jax.random.normal(k_conv, (B, H, T), dtype=jnp.float32)
    encoder_conved = jax.random.normal(k_enc_c, (B, S, E), dtype=jnp.float32)
    encoder_combined = jax.random.normal(k_enc_b, (B, S, E), dtype=jnp.float32)

    # Deterministic synthetic parameters (torch nn.Linear layouts).
    w_h2e = jax.random.normal(k_w1, (E, H), dtype=jnp.float32) * 0.1  # hidden2embed.weight
    b_h2e = jax.random.normal(k_b1, (E,), dtype=jnp.float32) * 0.1    # hidden2embed.bias
    w_e2h = jax.random.normal(k_w2, (H, E), dtype=jnp.float32) * 0.1  # embed2hidden.weight
    b_e2h = jax.random.normal(k_b2, (H,), dtype=jnp.float32) * 0.1    # embed2hidden.bias

    attn, attn_combined = attention_forward(
        embedded, conved, encoder_conved, encoder_combined, w_h2e, b_h2e, w_e2h, b_e2h)
    jax.block_until_ready((attn, attn_combined))

    # Verify against pure-JAX reference (approx reciprocal => ~1e-4 level error allowance).
    attn_ref, comb_ref = attention_reference(
        embedded, conved, encoder_conved, encoder_combined, w_h2e, b_h2e, w_e2h, b_e2h)
    assert attn.shape == (B, T, S) and attn_combined.shape == (B, H, T)
    assert jnp.allclose(attn, attn_ref, atol=2e-3, rtol=2e-3)
    assert jnp.allclose(attn_combined, comb_ref, atol=2e-3, rtol=2e-3)

    print("KERNEL_OK")
</pallas_src>

<mosaic_0001>
module attributes {stable_mosaic.version = 11 : i64} {
  func.func @attention_kernel(%arg0: i32, %arg1: memref<2x64x8xf32, #tpu.memory_space<vmem>>, %arg2: memref<2x8x32xf32, #tpu.memory_space<vmem>>, %arg3: memref<2x16x32xf32, #tpu.memory_space<vmem>>, %arg4: memref<2x16x32xf32, #tpu.memory_space<vmem>>, %arg5: memref<64x32xf32, #tpu.memory_space<vmem>>, %arg6: memref<1x32xf32, #tpu.memory_space<vmem>>, %arg7: memref<32x64xf32, #tpu.memory_space<vmem>>, %arg8: memref<1x64xf32, #tpu.memory_space<vmem>>, %arg9: memref<2x8x16xf32, #tpu.memory_space<vmem>>, %arg10: memref<2x64x8xf32, #tpu.memory_space<vmem>>) attributes {dimension_semantics = [#tpu.dimension_semantics<parallel>], iteration_bounds = array<i64: 1>, scalar_prefetch = 0 : i64, scratch_operands = 0 : i64, tpu.core_type = #tpu.core_type<tc>, window_params = [{transform_indices = @transform_0, window_bounds = array<i64: 2, 64, 8>}, {transform_indices = @transform_1, window_bounds = array<i64: 2, 8, 32>}, {transform_indices = @transform_2, window_bounds = array<i64: 2, 16, 32>}, {transform_indices = @transform_3, window_bounds = array<i64: 2, 16, 32>}, {pipeline_mode = #tpu.pipeline_mode<synchronous>, transform_indices = @transform_4, window_bounds = array<i64: 64, 32>}, {pipeline_mode = #tpu.pipeline_mode<synchronous>, transform_indices = @transform_5, window_bounds = array<i64: 1, 32>}, {pipeline_mode = #tpu.pipeline_mode<synchronous>, transform_indices = @transform_6, window_bounds = array<i64: 32, 64>}, {pipeline_mode = #tpu.pipeline_mode<synchronous>, transform_indices = @transform_7, window_bounds = array<i64: 1, 64>}, {transform_indices = @transform_8, window_bounds = array<i64: 2, 8, 16>}, {transform_indices = @transform_9, window_bounds = array<i64: 2, 64, 8>}]} {
    %c0 = arith.constant 0 : index
    %c0_0 = arith.constant 0 : index
    %c0_1 = arith.constant 0 : index
    %0 = vector.load %arg1[%c0, %c0_0, %c0_1] : memref<2x64x8xf32, #tpu.memory_space<vmem>>, vector<2x64x8xf32>
    %c0_2 = arith.constant 0 : index
    %c0_3 = arith.constant 0 : index
    %c0_4 = arith.constant 0 : index
    %1 = vector.load %arg2[%c0_2, %c0_3, %c0_4] : memref<2x8x32xf32, #tpu.memory_space<vmem>>, vector<2x8x32xf32>
    %c0_5 = arith.constant 0 : index
    %c0_6 = arith.constant 0 : index
    %c0_7 = arith.constant 0 : index
    %2 = vector.load %arg3[%c0_5, %c0_6, %c0_7] : memref<2x16x32xf32, #tpu.memory_space<vmem>>, vector<2x16x32xf32>
    %c0_8 = arith.constant 0 : index
    %c0_9 = arith.constant 0 : index
    %c0_10 = arith.constant 0 : index
    %3 = vector.load %arg4[%c0_8, %c0_9, %c0_10] : memref<2x16x32xf32, #tpu.memory_space<vmem>>, vector<2x16x32xf32>
    %c0_11 = arith.constant 0 : index
    %c0_12 = arith.constant 0 : index
    %4 = vector.load %arg5[%c0_11, %c0_12] : memref<64x32xf32, #tpu.memory_space<vmem>>, vector<64x32xf32>
    %c0_13 = arith.constant 0 : index
    %c0_14 = arith.constant 0 : index
    %5 = vector.load %arg6[%c0_13, %c0_14] : memref<1x32xf32, #tpu.memory_space<vmem>>, vector<1x32xf32>
    %c0_15 = arith.constant 0 : index
    %c0_16 = arith.constant 0 : index
    %6 = vector.load %arg7[%c0_15, %c0_16] : memref<32x64xf32, #tpu.memory_space<vmem>>, vector<32x64xf32>
    %c0_17 = arith.constant 0 : index
    %c0_18 = arith.constant 0 : index
    %7 = vector.load %arg8[%c0_17, %c0_18] : memref<1x64xf32, #tpu.memory_space<vmem>>, vector<1x64xf32>
    %8 = tpu.transpose %0, [0, 2, 1] : vector<2x64x8xf32> -> vector<2x8x64xf32>
    %9 = vector.shape_cast %8 : vector<2x8x64xf32> to vector<16x64xf32>
    %cst = arith.constant dense<0.000000e+00> : vector<16x32xf32>
    %10 = tpu.matmul %9, %4, %cst {dimension_numbers = #tpu.dot_dimension_numbers<[1], [0], [0], [1], [0, 0, 1, 1], [], []>} : vector<16x64xf32>, vector<64x32xf32>, vector<16x32xf32> -> vector<16x32xf32>
    %11 = vector.broadcast %5 : vector<1x32xf32> to vector<16x32xf32>
    %12 = arith.addf %10, %11 : vector<16x32xf32>
    %13 = vector.shape_cast %12 : vector<16x32xf32> to vector<2x8x32xf32>
    %14 = arith.addf %13, %1 : vector<2x8x32xf32>
    %cst_19 = arith.constant 0.707106769 : f32
    %15 = vector.broadcast %cst_19 : f32 to vector<2x8x32xf32>
    %16 = arith.mulf %14, %15 : vector<2x8x32xf32>
    %cst_20 = arith.constant dense<0.000000e+00> : vector<2x8x16xf32>
    %17 = tpu.matmul %16, %2, %cst_20 {dimension_numbers = #tpu.dot_dimension_numbers<[2], [2], [1], [1], [0, 0, 0, 1, 1, 1], [0], [0]>} : vector<2x8x32xf32>, vector<2x16x32xf32>, vector<2x8x16xf32> -> vector<2x8x16xf32>
    %cst_21 = arith.constant dense<0xFF800000> : vector<2x8xf32>
    %18 = vector.multi_reduction <maximumf>, %17, %cst_21 [2] : vector<2x8x16xf32> to vector<2x8xf32>
    %19 = vector.shape_cast %18 : vector<2x8xf32> to vector<2x8x1xf32>
    %20 = vector.broadcast %19 : vector<2x8x1xf32> to vector<2x8x16xf32>
    %21 = arith.subf %17, %20 : vector<2x8x16xf32>
    %22 = math.exp %21 : vector<2x8x16xf32>
    %cst_22 = arith.constant dense<0.000000e+00> : vector<2x8xf32>
    %23 = vector.multi_reduction <add>, %22, %cst_22 [2] : vector<2x8x16xf32> to vector<2x8xf32>
    %24 = vector.shape_cast %23 : vector<2x8xf32> to vector<2x8x1xf32>
    %25 = tpu.reciprocal %24 {approx = true} : vector<2x8x1xf32> -> vector<2x8x1xf32>
    %26 = vector.broadcast %25 : vector<2x8x1xf32> to vector<2x8x16xf32>
    %27 = arith.mulf %22, %26 : vector<2x8x16xf32>
    %cst_23 = arith.constant dense<0.000000e+00> : vector<2x8x32xf32>
    %28 = tpu.matmul %27, %3, %cst_23 {dimension_numbers = #tpu.dot_dimension_numbers<[2], [1], [1], [2], [0, 0, 0, 1, 1, 2], [0], [0]>} : vector<2x8x16xf32>, vector<2x16x32xf32>, vector<2x8x32xf32> -> vector<2x8x32xf32>
    %29 = vector.shape_cast %28 : vector<2x8x32xf32> to vector<16x32xf32>
    %cst_24 = arith.constant dense<0.000000e+00> : vector<16x64xf32>
    %30 = tpu.matmul %29, %6, %cst_24 {dimension_numbers = #tpu.dot_dimension_numbers<[1], [0], [0], [1], [0, 0, 1, 1], [], []>} : vector<16x32xf32>, vector<32x64xf32>, vector<16x64xf32> -> vector<16x64xf32>
    %31 = vector.broadcast %7 : vector<1x64xf32> to vector<16x64xf32>
    %32 = arith.addf %30, %31 : vector<16x64xf32>
    %33 = vector.shape_cast %32 : vector<16x64xf32> to vector<2x8x64xf32>
    %34 = tpu.transpose %33, [0, 2, 1] : vector<2x8x64xf32> -> vector<2x64x8xf32>
    %35 = arith.addf %0, %34 : vector<2x64x8xf32>
    %cst_25 = arith.constant 0.707106769 : f32
    %36 = vector.broadcast %cst_25 : f32 to vector<2x64x8xf32>
    %37 = arith.mulf %35, %36 : vector<2x64x8xf32>
    %c0_26 = arith.constant 0 : index
    %c0_27 = arith.constant 0 : index
    %c0_28 = arith.constant 0 : index
    %38 = vector.load %arg9[%c0_26, %c0_27, %c0_28] : memref<2x8x16xf32, #tpu.memory_space<vmem>>, vector<2x8x16xf32>
    tpu.vector_store %arg9[%c0_26, %c0_27, %c0_28], %27 {strides = array<i32>} : memref<2x8x16xf32, #tpu.memory_space<vmem>>, vector<2x8x16xf32>,
    %c0_29 = arith.constant 0 : index
    %c0_30 = arith.constant 0 : index
    %c0_31 = arith.constant 0 : index
    %39 = vector.load %arg10[%c0_29, %c0_30, %c0_31] : memref<2x64x8xf32, #tpu.memory_space<vmem>>, vector<2x64x8xf32>
    tpu.vector_store %arg10[%c0_29, %c0_30, %c0_31], %37 {strides = array<i32>} : memref<2x64x8xf32, #tpu.memory_space<vmem>>, vector<2x64x8xf32>,
    return
  }
  func.func @transform_0(%arg0: i32) -> (i32, i32, i32) {
    %c0_i32 = arith.constant 0 : i32
    %c0_i32_0 = arith.constant 0 : i32
    %c0_i32_1 = arith.constant 0 : i32
    return %arg0, %c0_i32, %c0_i32_0 : i32, i32, i32
  }
  func.func @transform_1(%arg0: i32) -> (i32, i32, i32) {
    %c0_i32 = arith.constant 0 : i32
    %c0_i32_0 = arith.constant 0 : i32
    %c0_i32_1 = arith.constant 0 : i32
    return %arg0, %c0_i32, %c0_i32_0 : i32, i32, i32
  }
  func.func @transform_2(%arg0: i32) -> (i32, i32, i32) {
    %c0_i32 = arith.constant 0 : i32
    %c0_i32_0 = arith.constant 0 : i32
    %c0_i32_1 = arith.constant 0 : i32
    return %arg0, %c0_i32, %c0_i32_0 : i32, i32, i32
  }
  func.func @transform_3(%arg0: i32) -> (i32, i32, i32) {
    %c0_i32 = arith.constant 0 : i32
    %c0_i32_0 = arith.constant 0 : i32
    %c0_i32_1 = arith.constant 0 : i32
    return %arg0, %c0_i32, %c0_i32_0 : i32, i32, i32
  }
  func.func @transform_4(%arg0: i32) -> (i32, i32) {
    %c0_i32 = arith.constant 0 : i32
    %c0_i32_0 = arith.constant 0 : i32
    %c0_i32_1 = arith.constant 0 : i32
    return %c0_i32, %c0_i32_0 : i32, i32
  }
  func.func @transform_5(%arg0: i32) -> (i32, i32) {
    %c0_i32 = arith.constant 0 : i32
    %c0_i32_0 = arith.constant 0 : i32
    %c0_i32_1 = arith.constant 0 : i32
    return %c0_i32, %c0_i32_0 : i32, i32
  }
  func.func @transform_6(%arg0: i32) -> (i32, i32) {
    %c0_i32 = arith.constant 0 : i32
    %c0_i32_0 = arith.constant 0 : i32
    %c0_i32_1 = arith.constant 0 : i32
    return %c0_i32, %c0_i32_0 : i32, i32
  }
  func.func @transform_7(%arg0: i32) -> (i32, i32) {
    %c0_i32 = arith.constant 0 : i32
    %c0_i32_0 = arith.constant 0 : i32
    %c0_i32_1 = arith.constant 0 : i32
    return %c0_i32, %c0_i32_0 : i32, i32
  }
  func.func @transform_8(%arg0: i32) -> (i32, i32, i32) {
    %c0_i32 = arith.constant 0 : i32
    %c0_i32_0 = arith.constant 0 : i32
    %c0_i32_1 = arith.constant 0 : i32
    return %arg0, %c0_i32, %c0_i32_0 : i32, i32, i32
  }
  func.func @transform_9(%arg0: i32) -> (i32, i32, i32) {
    %c0_i32 = arith.constant 0 : i32
    %c0_i32_0 = arith.constant 0 : i32
    %c0_i32_1 = arith.constant 0 : i32
    return %arg0, %c0_i32, %c0_i32_0 : i32, i32, i32
  }
}

</mosaic_0001>

<llo_original>
// kernel: tpu_custom_call.1
$region0: #{tpu_custom_call.1}
  #allocation0 [shape = 'u32[]', space=smem, size = 0x4, offset = 0x4, fixed_abs, tag = 'smem constant byte address 0x4 - core index']
  #allocation1 [shape = 'u32[144,128]{1,0:T(1,128)}', space=vmem, size = 0x12000, scoped, tag = 'internal scratch']
  %s0 = inlined_call_operand.vmem [shape: f32[2,64,8], index: 0, kind: input, shape index: {}]
  %s1 = inlined_call_operand.vmem [shape: f32[2,8,32], index: 1, kind: input, shape index: {}]
  %s2 = inlined_call_operand.vmem [shape: f32[2,16,32], index: 2, kind: input, shape index: {}]
  %s3 = inlined_call_operand.vmem [shape: f32[2,16,32], index: 3, kind: input, shape index: {}]
  %s4 = inlined_call_operand.vmem [shape: f32[64,32], index: 4, kind: input, shape index: {}]
  %s5 = inlined_call_operand.vmem [shape: f32[1,32], index: 5, kind: input, shape index: {}]
  %s6 = inlined_call_operand.vmem [shape: f32[32,64], index: 6, kind: input, shape index: {}]
  %s7 = inlined_call_operand.vmem [shape: f32[1,64], index: 7, kind: input, shape index: {}]
  %s8 = inlined_call_operand.hbm [shape: f32[2,8,16], index: 8, kind: output, shape index: {0}]
  %s9 = inlined_call_operand.vmem [shape: f32[2,64,8], index: 9, kind: output, shape index: {1}]
  %10 = xla_tuple %s8, %s9
  %s11 = sld [smem:[#allocation0]]
  $region50: #{tpu_custom_call.1} parent=0
    _
  %s13 = ssub.s32 1, %s11
  %s14 = scalar_select 0, %s13, %s11
  $region1: #{tpu_custom_call.1} parent=0
    #allocation2 [shape = 'u8[8192]{0}', space=vmem, size = 0x2000, scoped, tag = 'output window, operand 0, single buffered']
    #allocation3 [shape = 's32[1]{0}', space=sflag, size = 0x4, scoped, tag = 'scoped memory for tpu_custom_call.1']
    %15 = vsyncpa [#allocation3], 0
    // Predicated region
    $region2: #{tpu_custom_call.1} parent=1 // pred_check
      _
    $region3: #{tpu_custom_call.1} parent=1 // pred_check_branch
      %17 = sbr.rel (0) target = $region5
    $region4: #{tpu_custom_call.1} parent=1 // pred_region
      _
    $region5: #{tpu_custom_call.1} parent=1 // pred_fallthru
      _
    // Predicated region
    $region6: #{tpu_custom_call.1} parent=1 // pred_check
      _
    $region7: #{tpu_custom_call.1} parent=1 // pred_check_branch
      %19 = sbr.rel (0) target = $region9
    $region8: #{tpu_custom_call.1} parent=1 // pred_region
      _
    $region9: #{tpu_custom_call.1} parent=1 // pred_fallthru
      _
    // Predicated region
    $region10: #{tpu_custom_call.1} parent=1 // pred_check
      _
    $region11: #{tpu_custom_call.1} parent=1 // pred_check_branch
      %21 = sbr.rel (0) target = $region13
    $region12: #{tpu_custom_call.1} parent=1 // pred_region
      _
    $region13: #{tpu_custom_call.1} parent=1 // pred_fallthru
      _
    // Predicated region
    $region14: #{tpu_custom_call.1} parent=1 // pred_check
      _
    $region15: #{tpu_custom_call.1} parent=1 // pred_check_branch
      %23 = sbr.rel (0) target = $region17
    $region16: #{tpu_custom_call.1} parent=1 // pred_region
      _
    $region17: #{tpu_custom_call.1} parent=1 // pred_fallthru
      _
    // Predicated region
    $region18: #{tpu_custom_call.1} parent=1 // pred_check
      _
    $region19: #{tpu_custom_call.1} parent=1 // pred_check_branch
      %25 = sbr.rel (0) target = $region21
    $region20: #{tpu_custom_call.1} parent=1 // pred_region
      _
    $region21: #{tpu_custom_call.1} parent=1 // pred_fallthru
      _
    // Predicated region
    $region22: #{tpu_custom_call.1} parent=1 // pred_check
      _
    $region23: #{tpu_custom_call.1} parent=1 // pred_check_branch
      %27 = sbr.rel (0) target = $region25
    $region24: #{tpu_custom_call.1} parent=1 // pred_region
      _
    $region25: #{tpu_custom_call.1} parent=1 // pred_fallthru
      _
    // Predicated region
    $region26: #{tpu_custom_call.1} parent=1 // pred_check
      _
    $region27: #{tpu_custom_call.1} parent=1 // pred_check_branch
      %29 = sbr.rel (0) target = $region29
    $region28: #{tpu_custom_call.1} parent=1 // pred_region
      _
    $region29: #{tpu_custom_call.1} parent=1 // pred_fallthru
      _
    // Predicated region
    $region30: #{tpu_custom_call.1} parent=1 // pred_check
      _
    $region31: #{tpu_custom_call.1} parent=1 // pred_check_branch
      %31 = sbr.rel (0) target = $region33
    $region32: #{tpu_custom_call.1} parent=1 // pred_region
      _
    $region33: #{tpu_custom_call.1} parent=1 // pred_fallthru
      _
    %v32 = vld [vmem:[%s0] sm:$0xff]
    %v33 = vld [vmem:[%s0 + $0x8] sm:$0xff]
    %v34 = vld [vmem:[%s0 + $0x10] sm:$0xff]
    %v35 = vld [vmem:[%s0 + $0x18] sm:$0xff]
    %v36 = vld [vmem:[%s0 + $0x20] sm:$0xff]
    %v37 = vld [vmem:[%s0 + $0x28] sm:$0xff]
    %v38 = vld [vmem:[%s0 + $0x30] sm:$0xff]
    %v39 = vld [vmem:[%s0 + $0x38] sm:$0xff]
    %v40 = vld [vmem:[%s0 + $0x40] sm:$0xff]
    %v41 = vld [vmem:[%s0 + $0x48] sm:$0xff]
    %v42 = vld [vmem:[%s0 + $0x50] sm:$0xff]
    %v43 = vld [vmem:[%s0 + $0x58] sm:$0xff]
    %v44 = vld [vmem:[%s0 + $0x60] sm:$0xff]
    %v45 = vld [vmem:[%s0 + $0x68] sm:$0xff]
    %v46 = vld [vmem:[%s0 + $0x70] sm:$0xff]
    %v47 = vld [vmem:[%s0 + $0x78] sm:$0xff]
    %v48 = vld [vmem:[%s1] sm:$0xff]
    %v49 = vld [vmem:[%s1 + $0x8] sm:$0xff]
    %v50 = vld [vmem:[%s2] sm:$0xff]
    %v51 = vld [vmem:[%s2 + $0x8] sm:$0xff]
    %v52 = vld [vmem:[%s2 + $0x10] sm:$0xff]
    %v53 = vld [vmem:[%s2 + $0x18] sm:$0xff]
    %v54 = vld [vmem:[%s3] sm:$0xff]
    %v55 = vld [vmem:[%s3 + $0x8] sm:$0xff]
    %v56 = vld [vmem:[%s3 + $0x10] sm:$0xff]
    %v57 = vld [vmem:[%s3 + $0x18] sm:$0xff]
    %v58 = vld [vmem:[%s4] sm:$0xff]
    %v59 = vld [vmem:[%s4 + $0x8] sm:$0xff]
    %v60 = vld [vmem:[%s4 + $0x10] sm:$0xff]
    %v61 = vld [vmem:[%s4 + $0x18] sm:$0xff]
    %v62 = vld [vmem:[%s4 + $0x20] sm:$0xff]
    %v63 = vld [vmem:[%s4 + $0x28] sm:$0xff]
    %v64 = vld [vmem:[%s4 + $0x30] sm:$0xff]
    %v65 = vld [vmem:[%s4 + $0x38] sm:$0xff]
    %v66 = vld [vmem:[%s5] sm:$0x1]
    %v67 = vld [vmem:[%s6] sm:$0xff]
    %v68 = vld [vmem:[%s6 + $0x8] sm:$0xff]
    %v69 = vld [vmem:[%s6 + $0x10] sm:$0xff]
    %v70 = vld [vmem:[%s6 + $0x18] sm:$0xff]
    %v71 = vld [vmem:[%s7] sm:$0x1]
    %72 = vxpose.xlu0.b32.start [1/16] %v32, 128
    %73 = vxpose.xlu0.b32.cont [2/16] %v33, 128
    %74 = vxpose.xlu0.b32.cont [3/16] %v34, 128
    %75 = vxpose.xlu0.b32.cont [4/16] %v35, 128
    %76 = vxpose.xlu0.b32.cont [5/16] %v36, 128
    %77 = vxpose.xlu0.b32.cont [6/16] %v37, 128
    %78 = vxpose.xlu0.b32.cont [7/16] %v38, 128
    %79 = vxpose.xlu0.b32.cont [8/16] %v39, 128
    %80 = vxpose.xlu0.b32.cont [9/16] 0.0, 128
    %81 = vxpose.xlu0.b32.cont [10/16] 0.0, 128
    %82 = vxpose.xlu0.b32.cont [11/16] 0.0, 128
    %83 = vxpose.xlu0.b32.cont [12/16] 0.0, 128
    %84 = vxpose.xlu0.b32.cont [13/16] 0.0, 128
    %85 = vxpose.xlu0.b32.cont [14/16] 0.0, 128
    %86 = vxpose.xlu0.b32.cont [15/16] 0.0, 128
    %87 = vxpose.xlu0.b32.end [16/16] 0.0, 128
    %v88 = vpop.trf.xlu0
    %v89 = vpop.trf.xlu0
    %v90 = vpop.trf.xlu0
    %v91 = vpop.trf.xlu0
    %v92 = vpop.trf.xlu0
    %v93 = vpop.trf.xlu0
    %v94 = vpop.trf.xlu0
    %v95 = vpop.trf.xlu0
    %v96 = vpop.trf.xlu0
    %v97 = vpop.trf.xlu0
    %v98 = vpop.trf.xlu0
    %v99 = vpop.trf.xlu0
    %v100 = vpop.trf.xlu0
    %v101 = vpop.trf.xlu0
    %v102 = vpop.trf.xlu0
    %v103 = vpop.trf.xlu0
    %104 = vxpose.xlu0.b32.start [1/16] %v40, 128
    %105 = vxpose.xlu0.b32.cont [2/16] %v41, 128
    %106 = vxpose.xlu0.b32.cont [3/16] %v42, 128
    %107 = vxpose.xlu0.b32.cont [4/16] %v43, 128
    %108 = vxpose.xlu0.b32.cont [5/16] %v44, 128
    %109 = vxpose.xlu0.b32.cont [6/16] %v45, 128
    %110 = vxpose.xlu0.b32.cont [7/16] %v46, 128
    %111 = vxpose.xlu0.b32.cont [8/16] %v47, 128
    %112 = vxpose.xlu0.b32.cont [9/16] 0.0, 128
    %113 = vxpose.xlu0.b32.cont [10/16] 0.0, 128
    %114 = vxpose.xlu0.b32.cont [11/16] 0.0, 128
    %115 = vxpose.xlu0.b32.cont [12/16] 0.0, 128
    %116 = vxpose.xlu0.b32.cont [13/16] 0.0, 128
    %117 = vxpose.xlu0.b32.cont [14/16] 0.0, 128
    %118 = vxpose.xlu0.b32.cont [15/16] 0.0, 128
    %119 = vxpose.xlu0.b32.end [16/16] 0.0, 128
    %v120 = vpop.trf.xlu0
    %v121 = vpop.trf.xlu0
    %v122 = vpop.trf.xlu0
    %v123 = vpop.trf.xlu0
    %v124 = vpop.trf.xlu0
    %v125 = vpop.trf.xlu0
    %v126 = vpop.trf.xlu0
    %v127 = vpop.trf.xlu0
    %v128 = vpop.trf.xlu0
    %v129 = vpop.trf.xlu0
    %v130 = vpop.trf.xlu0
    %v131 = vpop.trf.xlu0
    %v132 = vpop.trf.xlu0
    %v133 = vpop.trf.xlu0
    %v134 = vpop.trf.xlu0
    %v135 = vpop.trf.xlu0
    %v137 = vlaneseq
    %v138 = vshrl.u32 %v137, 7
    %v139 = vsub.s32 0, %v138
    %v140 = vrot.slane %v66, %v139
    %vm142 = vcmask 523264
    %v144 = vsel %vm142, %v88, 0
    %v147 = vsel %vm142, %v120, 0
    %149 = vmatprep.subr.mxu0 0.0
    %150 = vmatpush1.msra.mxu0 %v58
    %151 = vmatprep.subr.mxu0 0.0
    %152 = vmatpush1.msra.mxu0 %v59
    %153 = vmatprep.subr.mxu0 0.0
    %154 = vmatpush1.msra.mxu0 %v60
    %155 = vmatprep.subr.mxu0 0.0
    %156 = vmatpush1.msra.mxu0 %v61
    %157 = vmatprep.subr.mxu0 0.0
    %158 = vmatpush1.msra.mxu0 %v62
    %159 = vmatprep.subr.mxu0 0.0
    %160 = vmatpush1.msra.mxu0 %v63
    %161 = vmatprep.subr.mxu0 0.0
    %162 = vmatpush1.msra.mxu0 %v64
    %163 = vmatprep.subr.mxu0 0.0
    %164 = vmatpush1.msra.mxu0 %v65
    %165 = vmatprep.subr.mxu0 0.0
    %166 = vmatpush1.msra.mxu0 0.0
    %167 = vmatprep.subr.mxu0 0.0
    %168 = vmatpush1.msra.mxu0 0.0
    %169 = vmatprep.subr.mxu0 0.0
    %170 = vmatpush1.msra.mxu0 0.0
    %171 = vmatprep.subr.mxu0 0.0
    %172 = vmatpush1.msra.mxu0 0.0
    %173 = vmatprep.subr.mxu0 0.0
    %174 = vmatpush1.msra.mxu0 0.0
    %175 = vmatprep.subr.mxu0 0.0
    %176 = vmatpush1.msra.mxu0 0.0
    %177 = vmatprep.subr.mxu0 0.0
    %178 = vmatpush1.msra.mxu0 0.0
    %179 = vmatprep.subr.mxu0 0.0
    %180 = vmatpush1.msra.mxu0 0.0
    %181 = vmatprep.subr.mxu0 0.0
    %182 = vmatpush1.msra.mxu0 0.0
    %183 = vmatprep.subr.mxu0 0.0
    %184 = vmatpush1.msra.mxu0 0.0
    %185 = vmatprep.subr.mxu0 0.0
    %186 = vmatpush1.msra.mxu0 0.0
    %187 = vmatprep.subr.mxu0 0.0
    %188 = vmatpush1.msra.mxu0 0.0
    %189 = vmatprep.subr.mxu0 0.0
    %190 = vmatpush1.msra.mxu0 0.0
    %191 = vmatprep.subr.mxu0 0.0
    %192 = vmatpush1.msra.mxu0 0.0
    %193 = vmatprep.subr.mxu0 0.0
    %194 = vmatpush1.msra.mxu0 0.0
    %195 = vmatprep.subr.mxu0 0.0
    %196 = vmatpush1.msra.mxu0 0.0
    %197 = vmatprep.subr.mxu0 0.0
    %198 = vmatpush1.msra.mxu0 0.0
    %199 = vmatprep.subr.mxu0 0.0
    %200 = vmatpush1.msra.mxu0 0.0
    %201 = vmatprep.subr.mxu0 0.0
    %202 = vmatpush1.msra.mxu0 0.0
    %203 = vmatprep.subr.mxu0 0.0
    %204 = vmatpush1.msra.mxu0 0.0
    %205 = vmatprep.subr.mxu0 0.0
    %206 = vmatpush1.msra.mxu0 0.0
    %207 = vmatprep.subr.mxu0 0.0
    %208 = vmatpush1.msra.mxu0 0.0
    %209 = vmatprep.subr.mxu0 0.0
    %210 = vmatpush1.msra.mxu0 0.0
    %211 = vmatprep.subr.mxu0 0.0
    %212 = vmatpush1.msra.mxu0 0.0
    %213 = vmatprep.mubr.f32.mxu0 0.0
    %214 = vmatmul.mubr.f32.gmra.mrb[0].mxu0 %v144
    %v215 = vpop.f32.mrb[0].mxu0
    %v216 = vadd.f32 %v140, %v215
    %v217 = vpop.f32.mrb[0].mxu0
    %218 = vmatprep.mubr.f32.mxu0 0.0
    %219 = vmatmul.mubr.f32.gmra.mrb[0].mxu0 %v147
    %v220 = vpop.f32.mrb[0].mxu0
    %v221 = vadd.f32 %v140, %v220
    %v222 = vpop.f32.mrb[0].mxu0
    %223 = vdwg.mxu0
    %v224 = vadd.f32 %v216, %v48
    %v225 = vadd.f32 %v221, %v49
    %v226 = vmul.f32 %v224, 0.70710677
    %v227 = vmul.f32 %v225, 0.70710677
    %vm228 = vcmask 261120
    %v230 = vsel %vm228, %v226, 0
    %v233 = vsel %vm228, %v50, 0
    %v236 = vsel %vm228, %v51, 0
    %238 = vmatprep.subr.mxu0 0.0
    %239 = vmatpush1.xpose.msra.mxu0 %v233
    %240 = vmatprep.subr.mxu0 0.0
    %241 = vmatpush1.xpose.msra.mxu0 %v236
    %242 = vmatprep.subr.mxu0 0.0
    %243 = vmatpush1.xpose.msra.mxu0 0.0
    %244 = vmatprep.subr.mxu0 0.0
    %245 = vmatpush1.xpose.msra.mxu0 0.0
    %246 = vmatprep.subr.mxu0 0.0
    %247 = vmatpush1.xpose.msra.mxu0 0.0
    %248 = vmatprep.subr.mxu0 0.0
    %249 = vmatpush1.xpose.msra.mxu0 0.0
    %250 = vmatprep.subr.mxu0 0.0
    %251 = vmatpush1.xpose.msra.mxu0 0.0
    %252 = vmatprep.subr.mxu0 0.0
    %253 = vmatpush1.xpose.msra.mxu0 0.0
    %254 = vmatprep.subr.mxu0 0.0
    %255 = vmatpush1.xpose.msra.mxu0 0.0
    %256 = vmatprep.subr.mxu0 0.0
    %257 = vmatpush1.xpose.msra.mxu0 0.0
    %258 = vmatprep.subr.mxu0 0.0
    %259 = vmatpush1.xpose.msra.mxu0 0.0
    %260 = vmatprep.subr.mxu0 0.0
    %261 = vmatpush1.xpose.msra.mxu0 0.0
    %262 = vmatprep.subr.mxu0 0.0
    %263 = vmatpush1.xpose.msra.mxu0 0.0
    %264 = vmatprep.subr.mxu0 0.0
    %265 = vmatpush1.xpose.msra.mxu0 0.0
    %266 = vmatprep.subr.mxu0 0.0
    %267 = vmatpush1.xpose.msra.mxu0 0.0
    %268 = vmatprep.subr.mxu0 0.0
    %269 = vmatpush1.xpose.msra.mxu0 0.0
    %270 = vmatprep.subr.mxu0 0.0
    %271 = vmatpush1.xpose.msra.mxu0 0.0
    %272 = vmatprep.subr.mxu0 0.0
    %273 = vmatpush1.xpose.msra.mxu0 0.0
    %274 = vmatprep.subr.mxu0 0.0
    %275 = vmatpush1.xpose.msra.mxu0 0.0
    %276 = vmatprep.subr.mxu0 0.0
    %277 = vmatpush1.xpose.msra.mxu0 0.0
    %278 = vmatprep.subr.mxu0 0.0
    %279 = vmatpush1.xpose.msra.mxu0 0.0
    %280 = vmatprep.subr.mxu0 0.0
    %281 = vmatpush1.xpose.msra.mxu0 0.0
    %282 = vmatprep.subr.mxu0 0.0
    %283 = vmatpush1.xpose.msra.mxu0 0.0
    %284 = vmatprep.subr.mxu0 0.0
    %285 = vmatpush1.xpose.msra.mxu0 0.0
    %286 = vmatprep.subr.mxu0 0.0
    %287 = vmatpush1.xpose.msra.mxu0 0.0
    %288 = vmatprep.subr.mxu0 0.0
    %289 = vmatpush1.xpose.msra.mxu0 0.0
    %290 = vmatprep.subr.mxu0 0.0
    %291 = vmatpush1.xpose.msra.mxu0 0.0
    %292 = vmatprep.subr.mxu0 0.0
    %293 = vmatpush1.xpose.msra.mxu0 0.0
    %294 = vmatprep.subr.mxu0 0.0
    %295 = vmatpush1.xpose.msra.mxu0 0.0
    %296 = vmatprep.subr.mxu0 0.0
    %297 = vmatpush1.xpose.msra.mxu0 0.0
    %298 = vmatprep.subr.mxu0 0.0
    %299 = vmatpush1.xpose.msra.mxu0 0.0
    %300 = vmatprep.subr.mxu0 0.0
    %301 = vmatpush1.xpose.msra.mxu0 0.0
    %302 = vmatprep.mubr.f32.mxu0 0.0
    %303 = vmatmul.mubr.f32.gmra.mrb[0].mxu0 %v230
    %v304 = vpop.f32.mrb[0].mxu0
    %v305 = vadd.f32 0.0, %v304
    %v306 = vpop.f32.mrb[0].mxu0
    %307 = vdwg.mxu0
    %v309 = vsel %vm228, %v227, 0
    %v312 = vsel %vm228, %v52, 0
    %v315 = vsel %vm228, %v53, 0
    %317 = vmatprep.subr.mxu0 0.0
    %318 = vmatpush1.xpose.msra.mxu0 %v312
    %319 = vmatprep.subr.mxu0 0.0
    %320 = vmatpush1.xpose.msra.mxu0 %v315
    %321 = vmatprep.subr.mxu0 0.0
    %322 = vmatpush1.xpose.msra.mxu0 0.0
    %323 = vmatprep.subr.mxu0 0.0
    %324 = vmatpush1.xpose.msra.mxu0 0.0
    %325 = vmatprep.subr.mxu0 0.0
    %326 = vmatpush1.xpose.msra.mxu0 0.0
    %327 = vmatprep.subr.mxu0 0.0
    %328 = vmatpush1.xpose.msra.mxu0 0.0
    %329 = vmatprep.subr.mxu0 0.0
    %330 = vmatpush1.xpose.msra.mxu0 0.0
    %331 = vmatprep.subr.mxu0 0.0
    %332 = vmatpush1.xpose.msra.mxu0 0.0
    %333 = vmatprep.subr.mxu0 0.0
    %334 = vmatpush1.xpose.msra.mxu0 0.0
    %335 = vmatprep.subr.mxu0 0.0
    %336 = vmatpush1.xpose.msra.mxu0 0.0
    %337 = vmatprep.subr.mxu0 0.0
    %338 = vmatpush1.xpose.msra.mxu0 0.0
    %339 = vmatprep.subr.mxu0 0.0
    %340 = vmatpush1.xpose.msra.mxu0 0.0
    %341 = vmatprep.subr.mxu0 0.0
    %342 = vmatpush1.xpose.msra.mxu0 0.0
    %343 = vmatprep.subr.mxu0 0.0
    %344 = vmatpush1.xpose.msra.mxu0 0.0
    %345 = vmatprep.subr.mxu0 0.0
    %346 = vmatpush1.xpose.msra.mxu0 0.0
    %347 = vmatprep.subr.mxu0 0.0
    %348 = vmatpush1.xpose.msra.mxu0 0.0
    %349 = vmatprep.subr.mxu0 0.0
    %350 = vmatpush1.xpose.msra.mxu0 0.0
    %351 = vmatprep.subr.mxu0 0.0
    %352 = vmatpush1.xpose.msra.mxu0 0.0
    %353 = vmatprep.subr.mxu0 0.0
    %354 = vmatpush1.xpose.msra.mxu0 0.0
    %355 = vmatprep.subr.mxu0 0.0
    %356 = vmatpush1.xpose.msra.mxu0 0.0
    %357 = vmatprep.subr.mxu0 0.0
    %358 = vmatpush1.xpose.msra.mxu0 0.0
    %359 = vmatprep.subr.mxu0 0.0
    %360 = vmatpush1.xpose.msra.mxu0 0.0
    %361 = vmatprep.subr.mxu0 0.0
    %362 = vmatpush1.xpose.msra.mxu0 0.0
    %363 = vmatprep.subr.mxu0 0.0
    %364 = vmatpush1.xpose.msra.mxu0 0.0
    %365 = vmatprep.subr.mxu0 0.0
    %366 = vmatpush1.xpose.msra.mxu0 0.0
    %367 = vmatprep.subr.mxu0 0.0
    %368 = vmatpush1.xpose.msra.mxu0 0.0
    %369 = vmatprep.subr.mxu0 0.0
    %370 = vmatpush1.xpose.msra.mxu0 0.0
    %371 = vmatprep.subr.mxu0 0.0
    %372 = vmatpush1.xpose.msra.mxu0 0.0
    %373 = vmatprep.subr.mxu0 0.0
    %374 = vmatpush1.xpose.msra.mxu0 0.0
    %375 = vmatprep.subr.mxu0 0.0
    %376 = vmatpush1.xpose.msra.mxu0 0.0
    %377 = vmatprep.subr.mxu0 0.0
    %378 = vmatpush1.xpose.msra.mxu0 0.0
    %379 = vmatprep.subr.mxu0 0.0
    %380 = vmatpush1.xpose.msra.mxu0 0.0
    %381 = vmatprep.mubr.f32.mxu0 0.0
    %382 = vmatmul.mubr.f32.gmra.mrb[0].mxu0 %v309
    %v383 = vpop.f32.mrb[0].mxu0
    %v384 = vadd.f32 0.0, %v383
    %v385 = vpop.f32.mrb[0].mxu0
    %386 = vdwg.mxu0
    %vm387 = vcmask 130048
    %v388 = vsel %vm387, %v305, -inf
    %389 = vmax.xlane.f32.xlu0 %v388
    %v390 = vpop.xlane.xlu0 %389
    %v391 = vsel %vm387, %v384, -inf
    %392 = vmax.xlane.f32.xlu0 %v391
    %v393 = vpop.xlane.xlu0 %392
    %v394 = vsub.f32 %v305, %v390
    %v395 = vsub.f32 %v384, %v393
    %v396 = vmul.f32 %v394, 1.442695
    %v397 = vpow.pop %v396
    %v398 = vmul.f32 %v395, 1.442695
    %v399 = vpow.pop %v398
    %v400 = vsel %vm387, %v397, 0.0
    %401 = vadd.xlane.f32.xlu0 %v400
    %v402 = vpop.xlane.xlu0 %401
    %v403 = vsel %vm387, %v399, 0.0
    %404 = vadd.xlane.f32.xlu0 %v403
    %v405 = vpop.xlane.xlu0 %404
    %v406 = vrcp.pop %v402
    %v407 = vrcp.pop %v405
    %v408 = vmul.f32 %v397, %v406
    %v409 = vmul.f32 %v399, %v407
    %v411 = vsel %vm387, %v408, 0
    %413 = vmatprep.subr.mxu0 0.0
    %414 = vmatpush1.msra.mxu0 %v54
    %415 = vmatprep.subr.mxu0 0.0
    %416 = vmatpush1.msra.mxu0 %v55
    %417 = vmatprep.subr.mxu0 0.0
    %418 = vmatpush1.msra.mxu0 0.0
    %419 = vmatprep.subr.mxu0 0.0
    %420 = vmatpush1.msra.mxu0 0.0
    %421 = vmatprep.subr.mxu0 0.0
    %422 = vmatpush1.msra.mxu0 0.0
    %423 = vmatprep.subr.mxu0 0.0
    %424 = vmatpush1.msra.mxu0 0.0
    %425 = vmatprep.subr.mxu0 0.0
    %426 = vmatpush1.msra.mxu0 0.0
    %427 = vmatprep.subr.mxu0 0.0
    %428 = vmatpush1.msra.mxu0 0.0
    %429 = vmatprep.subr.mxu0 0.0
    %430 = vmatpush1.msra.mxu0 0.0
    %431 = vmatprep.subr.mxu0 0.0
    %432 = vmatpush1.msra.mxu0 0.0
    %433 = vmatprep.subr.mxu0 0.0
    %434 = vmatpush1.msra.mxu0 0.0
    %435 = vmatprep.subr.mxu0 0.0
    %436 = vmatpush1.msra.mxu0 0.0
    %437 = vmatprep.subr.mxu0 0.0
    %438 = vmatpush1.msra.mxu0 0.0
    %439 = vmatprep.subr.mxu0 0.0
    %440 = vmatpush1.msra.mxu0 0.0
    %441 = vmatprep.subr.mxu0 0.0
    %442 = vmatpush1.msra.mxu0 0.0
    %443 = vmatprep.subr.mxu0 0.0
    %444 = vmatpush1.msra.mxu0 0.0
    %445 = vmatprep.subr.mxu0 0.0
    %446 = vmatpush1.msra.mxu0 0.0
    %447 = vmatprep.subr.mxu0 0.0
    %448 = vmatpush1.msra.mxu0 0.0
    %449 = vmatprep.subr.mxu0 0.0
    %450 = vmatpush1.msra.mxu0 0.0
    %451 = vmatprep.subr.mxu0 0.0
    %452 = vmatpush1.msra.mxu0 0.0
    %453 = vmatprep.subr.mxu0 0.0
    %454 = vmatpush1.msra.mxu0 0.0
    %455 = vmatprep.subr.mxu0 0.0
    %456 = vmatpush1.msra.mxu0 0.0
    %457 = vmatprep.subr.mxu0 0.0
    %458 = vmatpush1.msra.mxu0 0.0
    %459 = vmatprep.subr.mxu0 0.0
    %460 = vmatpush1.msra.mxu0 0.0
    %461 = vmatprep.subr.mxu0 0.0
    %462 = vmatpush1.msra.mxu0 0.0
    %463 = vmatprep.subr.mxu0 0.0
    %464 = vmatpush1.msra.mxu0 0.0
    %465 = vmatprep.subr.mxu0 0.0
    %466 = vmatpush1.msra.mxu0 0.0
    %467 = vmatprep.subr.mxu0 0.0
    %468 = vmatpush1.msra.mxu0 0.0
    %469 = vmatprep.subr.mxu0 0.0
    %470 = vmatpush1.msra.mxu0 0.0
    %471 = vmatprep.subr.mxu0 0.0
    %472 = vmatpush1.msra.mxu0 0.0
    %473 = vmatprep.subr.mxu0 0.0
    %474 = vmatpush1.msra.mxu0 0.0
    %475 = vmatprep.subr.mxu0 0.0
    %476 = vmatpush1.msra.mxu0 0.0
    %477 = vmatprep.mubr.f32.mxu0 0.0
    %478 = vmatmul.mubr.f32.gmra.mrb[0].mxu0 %v411
    %v479 = vpop.f32.mrb[0].mxu0
    %v480 = vadd.f32 0.0, %v479
    %v481 = vpop.f32.mrb[0].mxu0
    %482 = vdwg.mxu0
    %v484 = vsel %vm387, %v409, 0
    %486 = vmatprep.subr.mxu0 0.0
    %487 = vmatpush1.msra.mxu0 %v56
    %488 = vmatprep.subr.mxu0 0.0
    %489 = vmatpush1.msra.mxu0 %v57
    %490 = vmatprep.subr.mxu0 0.0
    %491 = vmatpush1.msra.mxu0 0.0
    %492 = vmatprep.subr.mxu0 0.0
    %493 = vmatpush1.msra.mxu0 0.0
    %494 = vmatprep.subr.mxu0 0.0
    %495 = vmatpush1.msra.mxu0 0.0
    %496 = vmatprep.subr.mxu0 0.0
    %497 = vmatpush1.msra.mxu0 0.0
    %498 = vmatprep.subr.mxu0 0.0
    %499 = vmatpush1.msra.mxu0 0.0
    %500 = vmatprep.subr.mxu0 0.0
    %501 = vmatpush1.msra.mxu0 0.0
    %502 = vmatprep.subr.mxu0 0.0
    %503 = vmatpush1.msra.mxu0 0.0
    %504 = vmatprep.subr.mxu0 0.0
    %505 = vmatpush1.msra.mxu0 0.0
    %506 = vmatprep.subr.mxu0 0.0
    %507 = vmatpush1.msra.mxu0 0.0
    %508 = vmatprep.subr.mxu0 0.0
    %509 = vmatpush1.msra.mxu0 0.0
    %510 = vmatprep.subr.mxu0 0.0
    %511 = vmatpush1.msra.mxu0 0.0
    %512 = vmatprep.subr.mxu0 0.0
    %513 = vmatpush1.msra.mxu0 0.0
    %514 = vmatprep.subr.mxu0 0.0
    %515 = vmatpush1.msra.mxu0 0.0
    %516 = vmatprep.subr.mxu0 0.0
    %517 = vmatpush1.msra.mxu0 0.0
    %518 = vmatprep.subr.mxu0 0.0
    %519 = vmatpush1.msra.mxu0 0.0
    %520 = vmatprep.subr.mxu0 0.0
    %521 = vmatpush1.msra.mxu0 0.0
    %522 = vmatprep.subr.mxu0 0.0
    %523 = vmatpush1.msra.mxu0 0.0
    %524 = vmatprep.subr.mxu0 0.0
    %525 = vmatpush1.msra.mxu0 0.0
    %526 = vmatprep.subr.mxu0 0.0
    %527 = vmatpush1.msra.mxu0 0.0
    %528 = vmatprep.subr.mxu0 0.0
    %529 = vmatpush1.msra.mxu0 0.0
    %530 = vmatprep.subr.mxu0 0.0
    %531 = vmatpush1.msra.mxu0 0.0
    %532 = vmatprep.subr.mxu0 0.0
    %533 = vmatpush1.msra.mxu0 0.0
    %534 = vmatprep.subr.mxu0 0.0
    %535 = vmatpush1.msra.mxu0 0.0
    %536 = vmatprep.subr.mxu0 0.0
    %537 = vmatpush1.msra.mxu0 0.0
    %538 = vmatprep.subr.mxu0 0.0
    %539 = vmatpush1.msra.mxu0 0.0
    %540 = vmatprep.subr.mxu0 0.0
    %541 = vmatpush1.msra.mxu0 0.0
    %542 = vmatprep.subr.mxu0 0.0
    %543 = vmatpush1.msra.mxu0 0.0
    %544 = vmatprep.subr.mxu0 0.0
    %545 = vmatpush1.msra.mxu0 0.0
    %546 = vmatprep.subr.mxu0 0.0
    %547 = vmatpush1.msra.mxu0 0.0
    %548 = vmatprep.subr.mxu0 0.0
    %549 = vmatpush1.msra.mxu0 0.0
    %550 = vmatprep.mubr.f32.mxu0 0.0
    %551 = vmatmul.mubr.f32.gmra.mrb[0].mxu0 %v484
    %v552 = vpop.f32.mrb[0].mxu0
    %v553 = vadd.f32 0.0, %v552
    %v554 = vpop.f32.mrb[0].mxu0
    %555 = vdwg.mxu0
    %v557 = vlaneseq
    %v558 = vshrl.u32 %v557, 7
    %v559 = vsub.s32 0, %v558
    %v560 = vrot.slane %v71, %v559
    %v563 = vsel %vm228, %v480, 0
    %v566 = vsel %vm228, %v553, 0
    %568 = vmatprep.subr.mxu0 0.0
    %569 = vmatpush1.msra.mxu0 %v67
    %570 = vmatprep.subr.mxu0 0.0
    %571 = vmatpush1.msra.mxu0 %v68
    %572 = vmatprep.subr.mxu0 0.0
    %573 = vmatpush1.msra.mxu0 %v69
    %574 = vmatprep.subr.mxu0 0.0
    %575 = vmatpush1.msra.mxu0 %v70
    %576 = vmatprep.subr.mxu0 0.0
    %577 = vmatpush1.msra.mxu0 0.0
    %578 = vmatprep.subr.mxu0 0.0
    %579 = vmatpush1.msra.mxu0 0.0
    %580 = vmatprep.subr.mxu0 0.0
    %581 = vmatpush1.msra.mxu0 0.0
    %582 = vmatprep.subr.mxu0 0.0
    %583 = vmatpush1.msra.mxu0 0.0
    %584 = vmatprep.subr.mxu0 0.0
    %585 = vmatpush1.msra.mxu0 0.0
    %586 = vmatprep.subr.mxu0 0.0
    %587 = vmatpush1.msra.mxu0 0.0
    %588 = vmatprep.subr.mxu0 0.0
    %589 = vmatpush1.msra.mxu0 0.0
    %590 = vmatprep.subr.mxu0 0.0
    %591 = vmatpush1.msra.mxu0 0.0
    %592 = vmatprep.subr.mxu0 0.0
    %593 = vmatpush1.msra.mxu0 0.0
    %594 = vmatprep.subr.mxu0 0.0
    %595 = vmatpush1.msra.mxu0 0.0
    %596 = vmatprep.subr.mxu0 0.0
    %597 = vmatpush1.msra.mxu0 0.0
    %598 = vmatprep.subr.mxu0 0.0
    %599 = vmatpush1.msra.mxu0 0.0
    %600 = vmatprep.subr.mxu0 0.0
    %601 = vmatpush1.msra.mxu0 0.0
    %602 = vmatprep.subr.mxu0 0.0
    %603 = vmatpush1.msra.mxu0 0.0
    %604 = vmatprep.subr.mxu0 0.0
    %605 = vmatpush1.msra.mxu0 0.0
    %606 = vmatprep.subr.mxu0 0.0
    %607 = vmatpush1.msra.mxu0 0.0
    %608 = vmatprep.subr.mxu0 0.0
    %609 = vmatpush1.msra.mxu0 0.0
    %610 = vmatprep.subr.mxu0 0.0
    %611 = vmatpush1.msra.mxu0 0.0
    %612 = vmatprep.subr.mxu0 0.0
    %613 = vmatpush1.msra.mxu0 0.0
    %614 = vmatprep.subr.mxu0 0.0
    %615 = vmatpush1.msra.mxu0 0.0
    %616 = vmatprep.subr.mxu0 0.0
    %617 = vmatpush1.msra.mxu0 0.0
    %618 = vmatprep.subr.mxu0 0.0
    %619 = vmatpush1.msra.mxu0 0.0
    %620 = vmatprep.subr.mxu0 0.0
    %621 = vmatpush1.msra.mxu0 0.0
    %622 = vmatprep.subr.mxu0 0.0
    %623 = vmatpush1.msra.mxu0 0.0
    %624 = vmatprep.subr.mxu0 0.0
    %625 = vmatpush1.msra.mxu0 0.0
    %626 = vmatprep.subr.mxu0 0.0
    %627 = vmatpush1.msra.mxu0 0.0
    %628 = vmatprep.subr.mxu0 0.0
    %629 = vmatpush1.msra.mxu0 0.0
    %630 = vmatprep.subr.mxu0 0.0
    %631 = vmatpush1.msra.mxu0 0.0
    %632 = vmatprep.mubr.f32.mxu0 0.0
    %633 = vmatmul.mubr.f32.gmra.mrb[0].mxu0 %v563
    %v634 = vpop.f32.mrb[0].mxu0
    %v635 = vadd.f32 %v560, %v634
    %v636 = vpop.f32.mrb[0].mxu0
    %637 = vmatprep.mubr.f32.mxu0 0.0
    %638 = vmatmul.mubr.f32.gmra.mrb[0].mxu0 %v566
    %v639 = vpop.f32.mrb[0].mxu0
    %v640 = vadd.f32 %v560, %v639
    %v641 = vpop.f32.mrb[0].mxu0
    %642 = vdwg.mxu0
    %643 = vxpose.xlu0.b32.start [1/16] %v635, 128
    %644 = vxpose.xlu0.b32.cont [2/16] 0.0, 128
    %645 = vxpose.xlu0.b32.cont [3/16] 0.0, 128
    %646 = vxpose.xlu0.b32.cont [4/16] 0.0, 128
    %647 = vxpose.xlu0.b32.cont [5/16] 0.0, 128
    %648 = vxpose.xlu0.b32.cont [6/16] 0.0, 128
    %649 = vxpose.xlu0.b32.cont [7/16] 0.0, 128
    %650 = vxpose.xlu0.b32.cont [8/16] 0.0, 128
    %651 = vxpose.xlu0.b32.cont [9/16] 0.0, 128
    %652 = vxpose.xlu0.b32.cont [10/16] 0.0, 128
    %653 = vxpose.xlu0.b32.cont [11/16] 0.0, 128
    %654 = vxpose.xlu0.b32.cont [12/16] 0.0, 128
    %655 = vxpose.xlu0.b32.cont [13/16] 0.0, 128
    %656 = vxpose.xlu0.b32.cont [14/16] 0.0, 128
    %657 = vxpose.xlu0.b32.cont [15/16] 0.0, 128
    %658 = vxpose.xlu0.b32.end [16/16] 0.0, 128
    %v659 = vpop.trf.xlu0
    %v660 = vpop.trf.xlu0
    %v661 = vpop.trf.xlu0
    %v662 = vpop.trf.xlu0
    %v663 = vpop.trf.xlu0
    %v664 = vpop.trf.xlu0
    %v665 = vpop.trf.xlu0
    %v666 = vpop.trf.xlu0
    %v667 = vpop.trf.xlu0
    %v668 = vpop.trf.xlu0
    %v669 = vpop.trf.xlu0
    %v670 = vpop.trf.xlu0
    %v671 = vpop.trf.xlu0
    %v672 = vpop.trf.xlu0
    %v673 = vpop.trf.xlu0
    %v674 = vpop.trf.xlu0
    %675 = vxpose.xlu0.b32.start [1/16] %v640, 128
    %676 = vxpose.xlu0.b32.cont [2/16] 0.0, 128
    %677 = vxpose.xlu0.b32.cont [3/16] 0.0, 128
    %678 = vxpose.xlu0.b32.cont [4/16] 0.0, 128
    %679 = vxpose.xlu0.b32.cont [5/16] 0.0, 128
    %680 = vxpose.xlu0.b32.cont [6/16] 0.0, 128
    %681 = vxpose.xlu0.b32.cont [7/16] 0.0, 128
    %682 = vxpose.xlu0.b32.cont [8/16] 0.0, 128
    %683 = vxpose.xlu0.b32.cont [9/16] 0.0, 128
    %684 = vxpose.xlu0.b32.cont [10/16] 0.0, 128
    %685 = vxpose.xlu0.b32.cont [11/16] 0.0, 128
    %686 = vxpose.xlu0.b32.cont [12/16] 0.0, 128
    %687 = vxpose.xlu0.b32.cont [13/16] 0.0, 128
    %688 = vxpose.xlu0.b32.cont [14/16] 0.0, 128
    %689 = vxpose.xlu0.b32.cont [15/16] 0.0, 128
    %690 = vxpose.xlu0.b32.end [16/16] 0.0, 128
    %v691 = vpop.trf.xlu0
    %v692 = vpop.trf.xlu0
    %v693 = vpop.trf.xlu0
    %v694 = vpop.trf.xlu0
    %v695 = vpop.trf.xlu0
    %v696 = vpop.trf.xlu0
    %v697 = vpop.trf.xlu0
    %v698 = vpop.trf.xlu0
    %v699 = vpop.trf.xlu0
    %v700 = vpop.trf.xlu0
    %v701 = vpop.trf.xlu0
    %v702 = vpop.trf.xlu0
    %v703 = vpop.trf.xlu0
    %v704 = vpop.trf.xlu0
    %v705 = vpop.trf.xlu0
    %v706 = vpop.trf.xlu0
    %v707 = vadd.f32 %v32, %v659
    %v708 = vadd.f32 %v33, %v660
    %v709 = vadd.f32 %v34, %v661
    %v710 = vadd.f32 %v35, %v662
    %v711 = vadd.f32 %v36, %v663
    %v712 = vadd.f32 %v37, %v664
    %v713 = vadd.f32 %v38, %v665
    %v714 = vadd.f32 %v39, %v666
    %v715 = vadd.f32 %v40, %v691
    %v716 = vadd.f32 %v41, %v692
    %v717 = vadd.f32 %v42, %v693
    %v718 = vadd.f32 %v43, %v694
    %v719 = vadd.f32 %v44, %v695
    %v720 = vadd.f32 %v45, %v696
    %v721 = vadd.f32 %v46, %v697
    %v722 = vadd.f32 %v47, %v698
    %v723 = vmul.f32 %v707, 0.70710677
    %v724 = vmul.f32 %v708, 0.70710677
    %v725 = vmul.f32 %v709, 0.70710677
    %v726 = vmul.f32 %v710, 0.70710677
    %v727 = vmul.f32 %v711, 0.70710677
    %v728 = vmul.f32 %v712, 0.70710677
    %v729 = vmul.f32 %v713, 0.70710677
    %v730 = vmul.f32 %v714, 0.70710677
    %v731 = vmul.f32 %v715, 0.70710677
    %v732 = vmul.f32 %v716, 0.70710677
    %v733 = vmul.f32 %v717, 0.70710677
    %v734 = vmul.f32 %v718, 0.70710677
    %v735 = vmul.f32 %v719, 0.70710677
    %v736 = vmul.f32 %v720, 0.70710677
    %v737 = vmul.f32 %v721, 0.70710677
    %v738 = vmul.f32 %v722, 0.70710677
    %739 = vst.msk [vmem:[#allocation2] sm:$0xff] %vm387, %v408
    %740 = vst.msk [vmem:[#allocation2 + $0x8] sm:$0xff] %vm387, %v409
    %vm741 = vcmask 64512
    %742 = vst.msk [vmem:[%s9] sm:$0xff] %vm741, %v723
    %743 = vst.msk [vmem:[%s9 + $0x8] sm:$0xff] %vm741, %v724
    %744 = vst.msk [vmem:[%s9 + $0x10] sm:$0xff] %vm741, %v725
    %745 = vst.msk [vmem:[%s9 + $0x18] sm:$0xff] %vm741, %v726
    %746 = vst.msk [vmem:[%s9 + $0x20] sm:$0xff] %vm741, %v727
    %747 = vst.msk [vmem:[%s9 + $0x28] sm:$0xff] %vm741, %v728
    %748 = vst.msk [vmem:[%s9 + $0x30] sm:$0xff] %vm741, %v729
    %749 = vst.msk [vmem:[%s9 + $0x38] sm:$0xff] %vm741, %v730
    %750 = vst.msk [vmem:[%s9 + $0x40] sm:$0xff] %vm741, %v731
    %751 = vst.msk [vmem:[%s9 + $0x48] sm:$0xff] %vm741, %v732
    %752 = vst.msk [vmem:[%s9 + $0x50] sm:$0xff] %vm741, %v733
    %753 = vst.msk [vmem:[%s9 + $0x58] sm:$0xff] %vm741, %v734
    %754 = vst.msk [vmem:[%s9 + $0x60] sm:$0xff] %vm741, %v735
    %755 = vst.msk [vmem:[%s9 + $0x68] sm:$0xff] %vm741, %v736
    %756 = vst.msk [vmem:[%s9 + $0x70] sm:$0xff] %vm741, %v737
    %757 = vst.msk [vmem:[%s9 + $0x78] sm:$0xff] %vm741, %v738
    // Predicated region
    $region34: #{tpu_custom_call.1} parent=1 // pred_check
      _
    $region35: #{tpu_custom_call.1} parent=1 // pred_check_branch
      %759 = sbr.rel (0) target = $region37
    $region36: #{tpu_custom_call.1} parent=1 // pred_region
      %s761 = ssub.s32 256, 256
      %762 = vsyncadd [#allocation3], %s761
      %s763 = sshll.u32 [#allocation2], 4
      %s764 = int_to_ptr.vmem [resolvable:$true] %s763
      %769 = dma.vmem_to_hbm [thread:$0]  %s764, 256, %s8, [#allocation3], 128, 128, 8
    $region37: #{tpu_custom_call.1} parent=1 // pred_fallthru
      _
    // Predicated region
    $region38: #{tpu_custom_call.1} parent=1 // pred_check
      _
    $region39: #{tpu_custom_call.1} parent=1 // pred_check_branch
      %771 = sbr.rel (0) target = $region41
    $region40: #{tpu_custom_call.1} parent=1 // pred_region
      _
    $region41: #{tpu_custom_call.1} parent=1 // pred_fallthru
      _
    // Predicated region
    $region42: #{tpu_custom_call.1} parent=1 // pred_check
      _
    $region43: #{tpu_custom_call.1} parent=1 // pred_check_branch
      %773 = sbr.rel (0) target = $region45
    $region44: #{tpu_custom_call.1} parent=1 // pred_region
      %774 = dma.done [#allocation3], 256
    $region45: #{tpu_custom_call.1} parent=1 // pred_fallthru
      _
    // Predicated region
    $region46: #{tpu_custom_call.1} parent=1 // pred_check
      _
    $region47: #{tpu_custom_call.1} parent=1 // pred_check_branch
      %776 = sbr.rel (0) target = $region49
    $region48: #{tpu_custom_call.1} parent=1 // pred_region
      _
    $region49: #{tpu_custom_call.1} parent=1 // pred_fallthru
      _
    %777 = vsyncpa [#allocation3], 1

</llo_original>
